<compile_context>
chip_gen: v6e
topology: v6e:2x2x1
jax: 0.10.0
libtpu: 0.0.40
codegen_flags: <defaults>
</compile_context>

<pallas_src>
import math
from functools import partial

import jax
import jax.numpy as jnp
from jax.experimental import pallas as pl
from jax.experimental.pallas import tpu as pltpu

_MIB = 1024 * 1024


def _pixelwise_norm_kernel(c_alpha, sqrt_c, x_ref, o_ref):
    # Block: (1, C, HW_TILE).  Reduction over C (sublane axis) stays in-block.
    x = x_ref[...]
    xf = x.astype(jnp.float32)
    ssq = jnp.sum(xf * xf, axis=1, keepdims=True)                 # (1,1,TILE) f32
    # rsqrt(sum + C*alpha) * sqrt(C) == rsqrt(mean + alpha) (one fewer VPU mul);
    # rsqrt goes to the EUP (free slot for a mem-bound kernel).
    inv = jax.lax.rsqrt(ssq + jnp.float32(c_alpha)) * jnp.float32(sqrt_c)
    if o_ref.dtype == jnp.float32:
        o_ref[...] = xf * inv
    else:
        # bf16/f16: multiply in native dtype -> no second full-tile f32 temp.
        o_ref[...] = (x * inv.astype(x.dtype)).astype(o_ref.dtype)


def _physical_vmem_bytes():
    """Generation-aware physical VMEM (128 MiB v5e/v6e, 64 MiB per TC v7x)."""
    try:
        info = pltpu.get_tpu_info()
        vmem = getattr(info, "vmem_capacity_bytes", None)
        if vmem:
            return int(vmem)
    except Exception:
        pass
    return 64 * _MIB  # conservative fallback (v7x per-TensorCore)


def _pick_hw_tile(N, C, HW, itemsize, vmem_budget_bytes):
    """Lane tile chosen by bytes, not a fixed lane cap.

    Grow the (1, C, tile) block toward ~2 MiB (past the DMA roofline knee),
    subject to 2 in + 2 out double-buffered blocks fitting the VMEM budget
    (using the sublane-padded C for the footprint), then shrink if needed so
    the ("parallel","parallel") grid has >= 4 blocks for v7x's 2 TensorCores.
    """
    if HW < 128:
        # Block lane dim equal to the full array dim (explicitly allowed);
        # single (masked) store per (n) block, nothing to tile.
        return HW

    sublane_pack = 8 * max(1, 4 // itemsize)          # 8 f32 / 16 bf16 / 32 int8
    c_padded = pl.cdiv(C, sublane_pack) * sublane_pack
    bytes_per_lane = c_padded * itemsize

    max_by_vmem = vmem_budget_bytes // (4 * bytes_per_lane)   # 2 in + 2 out bufs
    target_by_bytes = (2 * _MIB) // bytes_per_lane            # ~2 MiB blocks
    tile = min(max_by_vmem, max(target_by_bytes, 128))
    tile = min(tile, pl.cdiv(HW, 128) * 128)                  # never exceed problem
    tile = max(128, (tile // 128) * 128)

    # Keep both TensorCores busy on v7x: aim for >= 4 total grid blocks.
    while tile > 128 and N * pl.cdiv(HW, tile) < 4:
        tile = max(128, ((tile // 2) // 128) * 128)
    return tile


def pixelwise_norm(x, alpha=1e-8, hw_tile=None, vmem_budget_bytes=None):
    """x: (N, C, H, W) -> x / sqrt(mean(x^2, axis=1, keepdims=True) + alpha)."""
    N, C, H, W = x.shape
    HW = H * W
    itemsize = jnp.dtype(x.dtype).itemsize

    if vmem_budget_bytes is None:
        phys = _physical_vmem_bytes()
        # ~1/3 of physical for the 4 pipelined blocks; the remainder is
        # headroom for compiler temporaries and safety on every generation.
        vmem_budget_bytes = max(8 * _MIB, min(phys // 3, 40 * _MIB))
    if hw_tile is None:
        hw_tile = _pick_hw_tile(N, C, HW, itemsize, vmem_budget_bytes)

    # Ragged HW: no pad/slice HBM round-trips. The grid over-covers HW and
    # only the final lane tile uses a masked store.
    grid = (N, pl.cdiv(HW, hw_tile))
    x_flat = x.reshape(N, C, HW)  # metadata-only

    # alpha is fixed at module init in the PyTorch spec -> trace-time consts.
    c_alpha = float(C) * float(alpha)
    sqrt_c = math.sqrt(float(C))

    # Explicit scoped-VMEM limit: budget + ~30% headroom (defaults are only
    # 16 MiB on v5e / 32 MiB on v6e,v7x and would silently constrain tiles).
    vmem_limit = int(vmem_budget_bytes * 1.3)

    out = pl.pallas_call(
        partial(_pixelwise_norm_kernel, c_alpha, sqrt_c),
        out_shape=jax.ShapeDtypeStruct((N, C, HW), x.dtype),
        grid_spec=pltpu.PrefetchScalarGridSpec(
            num_scalar_prefetch=0,
            grid=grid,
            in_specs=[pl.BlockSpec((1, C, hw_tile), lambda n, t: (n, 0, t))],
            out_specs=pl.BlockSpec((1, C, hw_tile), lambda n, t: (n, 0, t)),
        ),
        compiler_params=pltpu.CompilerParams(
            # Both axes independent -> shard across v7x's two TensorCores.
            dimension_semantics=("parallel", "parallel"),
            vmem_limit_bytes=vmem_limit,
        ),
    )(x_flat)

    return out.reshape(N, C, H, W)


if __name__ == "__main__":
    def ref(x, alpha=1e-8):
        xf = x.astype(jnp.float32)
        return (xf / jnp.sqrt(jnp.mean(xf * xf, axis=1, keepdims=True) + alpha)
                ).astype(x.dtype)

    # Main check: small (N, C, H, W) consistent with the module.
    x = jax.random.normal(jax.random.PRNGKey(0), (2, 4, 16, 16), dtype=jnp.float32)
    y = jax.block_until_ready(pixelwise_norm(x, alpha=1e-8))
    assert y.shape == x.shape and y.dtype == x.dtype
    assert jnp.allclose(y, ref(x), atol=1e-5, rtol=1e-5)

    # Ragged HW < 128: block lane dim equals the full spatial dim.
    x2 = jax.random.normal(jax.random.PRNGKey(1), (2, 8, 10, 10), dtype=jnp.float32)
    y2 = jax.block_until_ready(pixelwise_norm(x2))
    assert y2.shape == x2.shape
    assert jnp.allclose(y2, ref(x2), atol=1e-5, rtol=1e-5)

    # Ragged HW > 128, not a multiple of the tile: masked store on the tail
    # tile only (no pad/slice HBM passes).
    x3 = jax.random.normal(jax.random.PRNGKey(2), (1, 8, 12, 12), dtype=jnp.float32)
    y3 = jax.block_until_ready(pixelwise_norm(x3))
    assert y3.shape == x3.shape
    assert jnp.allclose(y3, ref(x3), atol=1e-5, rtol=1e-5)

    # bf16 path: f32 accumulation, final multiply in native dtype.
    x4 = jax.random.normal(jax.random.PRNGKey(3), (2, 4, 16, 16), dtype=jnp.bfloat16)
    y4 = jax.block_until_ready(pixelwise_norm(x4))
    assert y4.dtype == jnp.bfloat16
    assert jnp.allclose(y4.astype(jnp.float32), ref(x4).astype(jnp.float32),
                        atol=5e-2, rtol=5e-2)

    print("KERNEL_OK")
</pallas_src>

<mosaic_0001>
module attributes {stable_mosaic.version = 11 : i64} {
  func.func @_pixelwise_norm_kernel(%arg0: i32, %arg1: i32, %arg2: memref<1x4x128xf32, #tpu.memory_space<vmem>>, %arg3: memref<1x4x128xf32, #tpu.memory_space<vmem>>) attributes {dimension_semantics = [#tpu.dimension_semantics<parallel>, #tpu.dimension_semantics<parallel>], iteration_bounds = array<i64: 2, 2>, scalar_prefetch = 0 : i64, scratch_operands = 0 : i64, tpu.core_type = #tpu.core_type<tc>, window_params = [{transform_indices = @transform_0, window_bounds = array<i64: 1, 4, 128>}, {transform_indices = @transform_1, window_bounds = array<i64: 1, 4, 128>}]} {
    %c0 = arith.constant 0 : index
    %c0_0 = arith.constant 0 : index
    %c0_1 = arith.constant 0 : index
    %0 = vector.load %arg2[%c0, %c0_0, %c0_1] : memref<1x4x128xf32, #tpu.memory_space<vmem>>, vector<1x4x128xf32>
    %1 = arith.mulf %0, %0 : vector<1x4x128xf32>
    %cst = arith.constant dense<0.000000e+00> : vector<1x128xf32>
    %2 = vector.multi_reduction <add>, %1, %cst [1] : vector<1x4x128xf32> to vector<1x128xf32>
    %3 = vector.shape_cast %2 : vector<1x128xf32> to vector<1x1x128xf32>
    %cst_2 = arith.constant 4.000000e-08 : f32
    %4 = vector.broadcast %cst_2 : f32 to vector<1x1x128xf32>
    %5 = arith.addf %3, %4 : vector<1x1x128xf32>
    %6 = math.rsqrt %5 : vector<1x1x128xf32>
    %cst_3 = arith.constant 2.000000e+00 : f32
    %7 = vector.broadcast %cst_3 : f32 to vector<1x1x128xf32>
    %8 = arith.mulf %6, %7 : vector<1x1x128xf32>
    %9 = vector.broadcast %8 : vector<1x1x128xf32> to vector<1x4x128xf32>
    %10 = arith.mulf %0, %9 : vector<1x4x128xf32>
    %c0_4 = arith.constant 0 : index
    %c0_5 = arith.constant 0 : index
    %c0_6 = arith.constant 0 : index
    %11 = vector.load %arg3[%c0_4, %c0_5, %c0_6] : memref<1x4x128xf32, #tpu.memory_space<vmem>>, vector<1x4x128xf32>
    tpu.vector_store %arg3[%c0_4, %c0_5, %c0_6], %10 {strides = array<i32>} : memref<1x4x128xf32, #tpu.memory_space<vmem>>, vector<1x4x128xf32>,
    return
  }
  func.func @transform_0(%arg0: i32, %arg1: i32) -> (i32, i32, i32) {
    %c0_i32 = arith.constant 0 : i32
    %c0_i32_0 = arith.constant 0 : i32
    return %arg0, %c0_i32, %arg1 : i32, i32, i32
  }
  func.func @transform_1(%arg0: i32, %arg1: i32) -> (i32, i32, i32) {
    %c0_i32 = arith.constant 0 : i32
    %c0_i32_0 = arith.constant 0 : i32
    return %arg0, %c0_i32, %arg1 : i32, i32, i32
  }
}

</mosaic_0001>

<llo_original>
// kernel: tpu_custom_call.1
$region0: #{tpu_custom_call.1}
  #allocation0 [shape = 'u32[]', space=smem, size = 0x4, offset = 0x4, fixed_abs, tag = 'smem constant byte address 0x4 - core index']
  #allocation1 [shape = 'u32[144,128]{1,0:T(1,128)}', space=vmem, size = 0x12000, scoped, tag = 'internal scratch']
  %s0 = inlined_call_operand.hbm [shape: f32[2,4,256], index: 0, kind: input, shape index: {}]
  %s1 = inlined_call_operand.hbm [shape: f32[2,4,256], index: 1, kind: output, shape index: {}]
  %s2 = sld [smem:[#allocation0]]
  $region41: #{tpu_custom_call.1} parent=0
    _
  %s4 = ssub.s32 1, %s2
  %s5 = scalar_select 0, %s4, %s2
  $region1: #{tpu_custom_call.1} parent=0
    #allocation2 [shape = 'u8[4096]{0}', space=vmem, size = 0x1000, scoped, tag = 'input window, operand 0']
    #allocation3 [shape = 's32[2]{0}', space=sflag, size = 0x8, scoped, tag = 'scoped memory for tpu_custom_call.1']
    #allocation4 [shape = 's32[2]{0}', space=sflag, size = 0x8, scoped, tag = 'scoped memory for tpu_custom_call.1']
    #allocation5 [shape = 'u8[4096]{0}', space=vmem, size = 0x1000, scoped, tag = 'output window, operand 0']
    %6 = vsyncpa [#allocation3], 0
    %s7 = scalar_lea.sflag [#allocation3], 1
    %8 = vsyncpa %s7, 0
    %9 = vsyncpa [#allocation4], 0
    %s10 = scalar_lea.sflag [#allocation4], 1
    %11 = vsyncpa %s10, 0
    loop: start=0, step=1, limit=6
    $region2: #{tpu_custom_call.1} parent=1 // loop_pre_header
      _
    $region3: #{tpu_custom_call.1} parent=1 // loop_header
      %s13 = sphi 0, %s17
      %p14 = scmp.ge.s32.totalorder %s13, 6
      %s20 = sphi 0, %s32
      %s21 = sphi 0, %s28
      %s22 = sphi 0, %s20
      %s23 = sphi 0, %s21
      %s24 = sphi 0, %s22
      %s25 = sphi 0, %s23
      %s37 = sphi 0, %s39
      %s40 = sphi 0, %s37
      %s41 = sphi 0, %s40
      %s57 = sphi 0, %s41
      %s65 = sphi 0, %s67
      %s68 = sphi 0, %s65
      %s69 = sphi 0, %s68
      %s85 = sphi 0, %s69
    $region4: #{tpu_custom_call.1} parent=1 // loop_header_branch
      %16 = sbr.rel (%p14) target = $region8
    $region5: #{tpu_custom_call.1} parent=1 // loop_body
      %s18 = ssub.s32 %s13, 1
      %s19 = ssub.s32 %s13, 2
      %s26 = sadd.s32 1, %s21
      %p27 = scmp.ge.s32.totalorder %s26, 2
      %s28 = scalar_select %p27, 0, %s26
      %s29 = sadd.s32 1, %s20
      %s30 = scalar_select %p27, %s29, %s20
      %p31 = scmp.ge.s32.totalorder %s30, 2
      %s32 = scalar_select %p31, 0, %s30
      %s33 = ssub.s32 %s20, %s32
      %s34 = ssub.s32 %s21, %s28
      %s35 = sor.u32 %s33, %s34
      %p36 = scmp.eq.s32.totalorder %s35, 0
      %s38 = sadd.s32 %s37, 1
      %s39 = scalar_select %p36, %s37, %s38
      %p42 = pneg %p36
      %p43 = scmp.eq.s32.totalorder %s13, 3
      %p44 = por %p42, %p43
      %p45 = scmp.ne.s32.totalorder %s37, %s40
      %p46 = scmp.eq.s32.totalorder %s13, 0
      %p47 = por %p45, %p46
      %p48 = scmp.ne.s32.totalorder %s37, %s40
      %p49 = scmp.eq.s32.totalorder %s18, 3
      %p50 = por %p48, %p49
      %p51 = scmp.ne.s32.totalorder %s40, %s41
      %p52 = scmp.eq.s32.totalorder %s18, 0
      %p53 = por %p51, %p52
      %p54 = scmp.ne.s32.totalorder %s40, %s41
      %p55 = scmp.eq.s32.totalorder %s19, 3
      %p56 = por %p54, %p55
      %p58 = scmp.ne.s32.totalorder %s41, %s57
      %p59 = scmp.eq.s32.totalorder %s19, 0
      %p60 = por %p58, %p59
      %s61 = ssub.s32 %s20, %s32
      %s62 = ssub.s32 %s21, %s28
      %s63 = sor.u32 %s61, %s62
      %p64 = scmp.eq.s32.totalorder %s63, 0
      %s66 = sadd.s32 %s65, 1
      %s67 = scalar_select %p64, %s65, %s66
      %p70 = pneg %p64
      %p71 = scmp.eq.s32.totalorder %s13, 3
      %p72 = por %p70, %p71
      %p73 = scmp.ne.s32.totalorder %s65, %s68
      %p74 = scmp.eq.s32.totalorder %s13, 0
      %p75 = por %p73, %p74
      %p76 = scmp.ne.s32.totalorder %s65, %s68
      %p77 = scmp.eq.s32.totalorder %s18, 3
      %p78 = por %p76, %p77
      %p79 = scmp.ne.s32.totalorder %s68, %s69
      %p80 = scmp.eq.s32.totalorder %s18, 0
      %p81 = por %p79, %p80
      %p82 = scmp.ne.s32.totalorder %s68, %s69
      %p83 = scmp.eq.s32.totalorder %s19, 3
      %p84 = por %p82, %p83
      %p86 = scmp.ne.s32.totalorder %s69, %s85
      %p87 = scmp.eq.s32.totalorder %s19, 0
      %p88 = por %p86, %p87
      %p89 = scmp.le.s32.totalorder 1, %s13
      %p90 = scmp.lt.s32.totalorder %s13, 5
      %p91 = pnand %p89, %p90
      %p92 = pneg %p91
      // Predicated region
      $region9: #{tpu_custom_call.1} parent=5 // pred_check
        _
      $region10: #{tpu_custom_call.1} parent=5 // pred_check_branch
        %94 = sbr.rel (%p91) target = $region12
      $region11: #{tpu_custom_call.1} parent=5 // pred_region
        %s95 = ssub.s32 %s13, 1
      $region12: #{tpu_custom_call.1} parent=5 // pred_fallthru
        _
      %p96 = scmp.lt.s32.totalorder %s13, 4
      // Predicated region
      $region13: #{tpu_custom_call.1} parent=5 // pred_check
        %p97 = pneg %p96
      $region14: #{tpu_custom_call.1} parent=5 // pred_check_branch
        %99 = sbr.rel (%p97) target = $region16
      $region15: #{tpu_custom_call.1} parent=5 // pred_region
        // Predicated region
        $region17: #{tpu_custom_call.1} parent=15 // pred_check
          %p100 = pneg %p47
        $region18: #{tpu_custom_call.1} parent=15 // pred_check_branch
          %102 = sbr.rel (%p100) target = $region20
        $region19: #{tpu_custom_call.1} parent=15 // pred_region
          %s103 = sand.u32 %s37, 1
          %s104 = scalar_lea.sflag [#allocation3], %s103
          %s105 = sand.u32 %s37, 1
          %s106 = smul.addr %s105, 4
          %s107 = scalar_lea.vmem [#allocation2], %s106
          %s109 = ssub.s32 64, 64
          %110 = vsyncadd %s104, %s109
          %s111 = smul.addr %s20, 2
          %s112 = sadd.s32 %s21, %s111
          %s113 = smul.addr %s112, 64
          %s114 = scalar_lea.hbm %s0, %s113
          %s116 = sshll.u32 %s107, 4
          %s117 = int_to_ptr.vmem [resolvable:$true] %s116
          %119 = dma.hbm_to_vmem [thread:$0]  %s114, 64, %s117, %s104
        $region20: #{tpu_custom_call.1} parent=15 // pred_fallthru
          _
      $region16: #{tpu_custom_call.1} parent=5 // pred_fallthru
        _
      %p120 = scmp.le.s32.totalorder 1, %s13
      %p121 = scmp.lt.s32.totalorder %s13, 5
      %p122 = pnand %p120, %p121
      %p123 = pneg %p122
      // Predicated region
      $region21: #{tpu_custom_call.1} parent=5 // pred_check
        _
      $region22: #{tpu_custom_call.1} parent=5 // pred_check_branch
        %125 = sbr.rel (%p122) target = $region24
      $region23: #{tpu_custom_call.1} parent=5 // pred_region
        %s126 = ssub.s32 %s13, 1
        %s127 = sand.u32 %s40, 1
        %s128 = scalar_lea.sflag [#allocation3], %s127
        %s129 = sand.u32 %s40, 1
        %s130 = smul.addr %s129, 4
        %s131 = scalar_lea.vmem [#allocation2], %s130
        // Predicated region
        $region25: #{tpu_custom_call.1} parent=23 // pred_check
          %p132 = pneg %p53
        $region26: #{tpu_custom_call.1} parent=23 // pred_check_branch
          %134 = sbr.rel (%p132) target = $region28
        $region27: #{tpu_custom_call.1} parent=23 // pred_region
          %135 = dma.done %s128, 64
        $region28: #{tpu_custom_call.1} parent=23 // pred_fallthru
          _
        %s136 = sand.u32 %s40, 1
        %s137 = scalar_lea.sflag [#allocation3], %s136
        %s138 = sand.u32 %s40, 1
        %s139 = smul.addr %s138, 4
        %s140 = scalar_lea.vmem [#allocation2], %s139
        %p141 = pneg %p53
        %p142 = pneg %p50
        %p143 = pneg %p81
        %p144 = pneg %p78
        %s145 = sand.u32 %s68, 1
        %s146 = scalar_lea.sflag [#allocation4], %s145
        %s147 = sand.u32 %s68, 1
        %s148 = smul.addr %s147, 4
        %s149 = scalar_lea.vmem [#allocation5], %s148
        %v150 = vld [vmem:[%s131] sm:$0xf]
        %v151 = vmul.f32 %v150, %v150
        %vm152 = vcmask 1043456
        %v153 = vsel %vm152, %v151, 0.0
        %v154 = vrot.slane %v153, 4
        %v155 = vadd.f32 %v153, %v154
        %v156 = vrot.slane %v155, 2
        %v157 = vadd.f32 %v155, %v156
        %v158 = vrot.slane %v157, 1
        %v159 = vadd.f32 %v157, %v158
        %v160 = vadd.f32 %v159, 4e-08
        %v161 = vrsqrt.pop %v160
        %v162 = vmul.f32 %v161, 2.0
        %v163 = vmul.f32 %v150, %v162
        %164 = vst [vmem:[%s149] sm:$0xf] %v163
        %s165 = sand.u32 %s68, 1
        %s166 = scalar_lea.sflag [#allocation4], %s165
        %s167 = sand.u32 %s68, 1
        %s168 = smul.addr %s167, 4
        %s169 = scalar_lea.vmem [#allocation5], %s168
        // Predicated region
        $region29: #{tpu_custom_call.1} parent=23 // pred_check
          %p170 = pneg %p78
        $region30: #{tpu_custom_call.1} parent=23 // pred_check_branch
          %172 = sbr.rel (%p170) target = $region32
        $region31: #{tpu_custom_call.1} parent=23 // pred_region
          %s174 = ssub.s32 64, 64
          %175 = vsyncadd %s166, %s174
          %s176 = smul.addr %s22, 2
          %s177 = sadd.s32 %s23, %s176
          %s178 = smul.addr %s177, 64
          %s179 = scalar_lea.hbm %s1, %s178
          %s181 = sshll.u32 %s169, 4
          %s182 = int_to_ptr.vmem [resolvable:$true] %s181
          %184 = dma.vmem_to_hbm [thread:$0]  %s182, 64, %s179, %s166
        $region32: #{tpu_custom_call.1} parent=23 // pred_fallthru
          _
      $region24: #{tpu_custom_call.1} parent=5 // pred_fallthru
        _
      %p185 = scmp.le.s32.totalorder 2, %s13
      // Predicated region
      $region33: #{tpu_custom_call.1} parent=5 // pred_check
        %p186 = pneg %p185
      $region34: #{tpu_custom_call.1} parent=5 // pred_check_branch
        %188 = sbr.rel (%p186) target = $region36
      $region35: #{tpu_custom_call.1} parent=5 // pred_region
        %s189 = ssub.s32 %s13, 2
        // Predicated region
        $region37: #{tpu_custom_call.1} parent=35 // pred_check
          %p190 = pneg %p84
        $region38: #{tpu_custom_call.1} parent=35 // pred_check_branch
          %192 = sbr.rel (%p190) target = $region40
        $region39: #{tpu_custom_call.1} parent=35 // pred_region
          %s193 = sand.u32 %s69, 1
          %s194 = scalar_lea.sflag [#allocation4], %s193
          %s195 = sand.u32 %s69, 1
          %s196 = smul.addr %s195, 4
          %s197 = scalar_lea.vmem [#allocation5], %s196
          %198 = dma.done %s194, 64
        $region40: #{tpu_custom_call.1} parent=35 // pred_fallthru
          _
      $region36: #{tpu_custom_call.1} parent=5 // pred_fallthru
        _
    $region6: #{tpu_custom_call.1} parent=1 // loop_footer
      %s17 = sadd.s32 1, %s13
    $region7: #{tpu_custom_call.1} parent=1 // loop_footer_branch
      %12 = sbr.rel target = $region3
    $region8: #{tpu_custom_call.1} parent=1 // loop_exit
      _
    %199 = vsyncpa [#allocation3], 1
    %s200 = scalar_lea.sflag [#allocation3], 1
    %201 = vsyncpa %s200, 1
    %202 = vsyncpa [#allocation4], 1
    %s203 = scalar_lea.sflag [#allocation4], 1
    %204 = vsyncpa %s203, 1

</llo_original>
